<compile_context>
chip_gen: v5e
topology: v5e:2x2
jax: 0.10.0
libtpu: 0.0.40
codegen_flags: <defaults>
</compile_context>

<pallas_src>
import jax
import jax.numpy as jnp
from jax.experimental import pallas as pl
from jax.experimental.pallas import tpu as pltpu

TB_MAX = 512      # batch tile (multiple of 128/256 MXU rows for real batches)
N3_PAD = 128      # lane-dense padded width of the fc3 output


def _round_up(n, m):
    return ((n + m - 1) // m) * m


def snake_nn_kernel(x_ref, w1_ref, b1_ref, w2_ref, b2_ref, w3_ref, b3_ref, o_ref):
    # x tile is bf16; all dots accumulate in f32 on the MXU.
    x = x_ref[...]                                                        # (TB, 11) bf16

    h1 = jnp.dot(x, w1_ref[...], preferred_element_type=jnp.float32)     # (TB, 256) f32
    h1 = jnp.maximum(h1 + b1_ref[...], 0.0)                              # bias + ReLU in f32

    h2 = jnp.dot(h1.astype(jnp.bfloat16), w2_ref[...],
                 preferred_element_type=jnp.float32)                     # (TB, 128) f32
    h2 = jnp.maximum(h2 + b2_ref[...], 0.0)

    h3 = jnp.dot(h2.astype(jnp.bfloat16), w3_ref[...],
                 preferred_element_type=jnp.float32)                     # (TB, 128) f32
    o_ref[...] = (h3 + b3_ref[...]).astype(o_ref.dtype)                  # lane-dense store


def snake_nn_forward(x, params):
    w1, b1, w2, b2, w3, b3 = params
    B, K = x.shape
    assert K == 11

    # Batch tile: multiple of 8, capped at TB_MAX; pad batch to a multiple of it.
    tb = min(TB_MAX, _round_up(B, 8))
    b_pad = _round_up(B, tb)

    x_p = x if b_pad == B else jnp.pad(x, ((0, b_pad - B), (0, 0)))
    x_p = x_p.astype(jnp.bfloat16)

    # bf16 weights for the MXU; biases stay f32.
    w1b = w1.astype(jnp.bfloat16)
    w2b = w2.astype(jnp.bfloat16)
    # Zero-pad fc3 from 3 to 128 output columns -> lane-dense output slab
    # (same single 128-wide MXU pass either way).
    w3p = jnp.pad(w3, ((0, 0), (0, N3_PAD - w3.shape[1]))).astype(jnp.bfloat16)
    b3p = jnp.pad(b3, ((0, 0), (0, N3_PAD - b3.shape[1])))

    def const_spec(a):
        return pl.BlockSpec(a.shape, lambda i: (0, 0))

    out = pl.pallas_call(
        snake_nn_kernel,
        out_shape=jax.ShapeDtypeStruct((b_pad, N3_PAD), jnp.float32),
        grid_spec=pl.GridSpec(
            grid=(b_pad // tb,),
            in_specs=[
                pl.BlockSpec((tb, 11), lambda i: (i, 0)),   # x: tiled over batch
                const_spec(w1b), const_spec(b1),            # weights/biases resident
                const_spec(w2b), const_spec(b2),
                const_spec(w3p), const_spec(b3p),
            ],
            out_specs=pl.BlockSpec((tb, N3_PAD), lambda i: (i, 0)),
        ),
        compiler_params=pltpu.CompilerParams(
            dimension_semantics=("parallel",),
            vmem_limit_bytes=32 * 1024 * 1024,
        ),
    )(x_p, w1b, b1, w2b, b2, w3p, b3p)

    return out[:B, :3]


def init_params(key):
    # PyTorch nn.Linear default init: uniform(-1/sqrt(fan_in), +1/sqrt(fan_in)).
    # Weights stored as (in, out) so kernel computes y = x @ W + b (== x @ W_pt.T + b).
    def linear(key, fan_in, fan_out):
        kw, kb = jax.random.split(key)
        bound = 1.0 / jnp.sqrt(fan_in)
        w = jax.random.uniform(kw, (fan_in, fan_out), jnp.float32, -bound, bound)
        b = jax.random.uniform(kb, (1, fan_out), jnp.float32, -bound, bound)
        return w, b

    k1, k2, k3 = jax.random.split(key, 3)
    w1, b1 = linear(k1, 11, 256)
    w2, b2 = linear(k2, 256, 128)
    w3, b3 = linear(k3, 128, 3)
    return (w1, b1, w2, b2, w3, b3)


def reference_forward(x, params):
    # Same bf16-matmul / f32-accumulate recipe as the kernel, in plain JAX.
    w1, b1, w2, b2, w3, b3 = params
    h1 = jax.nn.relu(
        jnp.dot(x.astype(jnp.bfloat16), w1.astype(jnp.bfloat16),
                preferred_element_type=jnp.float32) + b1)
    h2 = jax.nn.relu(
        jnp.dot(h1.astype(jnp.bfloat16), w2.astype(jnp.bfloat16),
                preferred_element_type=jnp.float32) + b2)
    return jnp.dot(h2.astype(jnp.bfloat16), w3.astype(jnp.bfloat16),
                   preferred_element_type=jnp.float32) + b3


if __name__ == "__main__":
    key = jax.random.PRNGKey(0)
    kp, kx1, kx2 = jax.random.split(key, 3)
    params = init_params(kp)

    # Small single-inference style batch (launch-latency-bound regime).
    B = 8
    x = jax.random.normal(kx1, (B, 11), jnp.float32)
    out = jax.block_until_ready(snake_nn_forward(x, params))
    ref = reference_forward(x, params)
    assert out.shape == (B, 3)
    assert jnp.allclose(out, ref, atol=2e-2, rtol=2e-2), "mismatch vs JAX reference (B=8)"

    # Larger batch: exercises the batch-tiled grid (tb=512, padded to 1024, 2 steps).
    B2 = 600
    x2 = jax.random.normal(kx2, (B2, 11), jnp.float32)
    out2 = jax.block_until_ready(snake_nn_forward(x2, params))
    ref2 = reference_forward(x2, params)
    assert out2.shape == (B2, 3)
    assert jnp.allclose(out2, ref2, atol=2e-2, rtol=2e-2), "mismatch vs JAX reference (B=600)"

    print("KERNEL_OK")
</pallas_src>

<mosaic_0001>
module attributes {stable_mosaic.version = 11 : i64} {
  func.func @snake_nn_kernel(%arg0: i32, %arg1: memref<8x11xbf16, #tpu.memory_space<vmem>>, %arg2: memref<11x256xbf16, #tpu.memory_space<vmem>>, %arg3: memref<1x256xf32, #tpu.memory_space<vmem>>, %arg4: memref<256x128xbf16, #tpu.memory_space<vmem>>, %arg5: memref<1x128xf32, #tpu.memory_space<vmem>>, %arg6: memref<128x128xbf16, #tpu.memory_space<vmem>>, %arg7: memref<1x128xf32, #tpu.memory_space<vmem>>, %arg8: memref<8x128xf32, #tpu.memory_space<vmem>>) attributes {dimension_semantics = [#tpu.dimension_semantics<parallel>], iteration_bounds = array<i64: 1>, scalar_prefetch = 0 : i64, scratch_operands = 0 : i64, tpu.core_type = #tpu.core_type<tc>, window_params = [{transform_indices = @transform_0, window_bounds = array<i64: 8, 11>}, {pipeline_mode = #tpu.pipeline_mode<synchronous>, transform_indices = @transform_1, window_bounds = array<i64: 11, 256>}, {pipeline_mode = #tpu.pipeline_mode<synchronous>, transform_indices = @transform_2, window_bounds = array<i64: 1, 256>}, {pipeline_mode = #tpu.pipeline_mode<synchronous>, transform_indices = @transform_3, window_bounds = array<i64: 256, 128>}, {pipeline_mode = #tpu.pipeline_mode<synchronous>, transform_indices = @transform_4, window_bounds = array<i64: 1, 128>}, {pipeline_mode = #tpu.pipeline_mode<synchronous>, transform_indices = @transform_5, window_bounds = array<i64: 128, 128>}, {pipeline_mode = #tpu.pipeline_mode<synchronous>, transform_indices = @transform_6, window_bounds = array<i64: 1, 128>}, {transform_indices = @transform_7, window_bounds = array<i64: 8, 128>}]} {
    %c0 = arith.constant 0 : index
    %c0_0 = arith.constant 0 : index
    %0 = vector.load %arg1[%c0, %c0_0] : memref<8x11xbf16, #tpu.memory_space<vmem>>, vector<8x11xbf16>
    %c0_1 = arith.constant 0 : index
    %c0_2 = arith.constant 0 : index
    %1 = vector.load %arg2[%c0_1, %c0_2] : memref<11x256xbf16, #tpu.memory_space<vmem>>, vector<11x256xbf16>
    %cst = arith.constant dense<0.000000e+00> : vector<8x256xf32>
    %2 = tpu.matmul %0, %1, %cst {dimension_numbers = #tpu.dot_dimension_numbers<[1], [0], [0], [1], [0, 0, 1, 1], [], []>} : vector<8x11xbf16>, vector<11x256xbf16>, vector<8x256xf32> -> vector<8x256xf32>
    %c0_3 = arith.constant 0 : index
    %c0_4 = arith.constant 0 : index
    %3 = vector.load %arg3[%c0_3, %c0_4] : memref<1x256xf32, #tpu.memory_space<vmem>>, vector<1x256xf32>
    %4 = vector.broadcast %3 : vector<1x256xf32> to vector<8x256xf32>
    %5 = arith.addf %2, %4 : vector<8x256xf32>
    %cst_5 = arith.constant 0.000000e+00 : f32
    %6 = vector.broadcast %cst_5 : f32 to vector<8x256xf32>
    %7 = arith.maximumf %5, %6 : vector<8x256xf32>
    %8 = arith.truncf %7 : vector<8x256xf32> to vector<8x256xbf16>
    %c0_6 = arith.constant 0 : index
    %c0_7 = arith.constant 0 : index
    %9 = vector.load %arg4[%c0_6, %c0_7] : memref<256x128xbf16, #tpu.memory_space<vmem>>, vector<256x128xbf16>
    %cst_8 = arith.constant dense<0.000000e+00> : vector<8x128xf32>
    %10 = tpu.matmul %8, %9, %cst_8 {dimension_numbers = #tpu.dot_dimension_numbers<[1], [0], [0], [1], [0, 0, 1, 1], [], []>} : vector<8x256xbf16>, vector<256x128xbf16>, vector<8x128xf32> -> vector<8x128xf32>
    %c0_9 = arith.constant 0 : index
    %c0_10 = arith.constant 0 : index
    %11 = vector.load %arg5[%c0_9, %c0_10] : memref<1x128xf32, #tpu.memory_space<vmem>>, vector<1x128xf32>
    %12 = vector.broadcast %11 : vector<1x128xf32> to vector<8x128xf32>
    %13 = arith.addf %10, %12 : vector<8x128xf32>
    %cst_11 = arith.constant 0.000000e+00 : f32
    %14 = vector.broadcast %cst_11 : f32 to vector<8x128xf32>
    %15 = arith.maximumf %13, %14 : vector<8x128xf32>
    %16 = arith.truncf %15 : vector<8x128xf32> to vector<8x128xbf16>
    %c0_12 = arith.constant 0 : index
    %c0_13 = arith.constant 0 : index
    %17 = vector.load %arg6[%c0_12, %c0_13] : memref<128x128xbf16, #tpu.memory_space<vmem>>, vector<128x128xbf16>
    %cst_14 = arith.constant dense<0.000000e+00> : vector<8x128xf32>
    %18 = tpu.matmul %16, %17, %cst_14 {dimension_numbers = #tpu.dot_dimension_numbers<[1], [0], [0], [1], [0, 0, 1, 1], [], []>} : vector<8x128xbf16>, vector<128x128xbf16>, vector<8x128xf32> -> vector<8x128xf32>
    %c0_15 = arith.constant 0 : index
    %c0_16 = arith.constant 0 : index
    %19 = vector.load %arg7[%c0_15, %c0_16] : memref<1x128xf32, #tpu.memory_space<vmem>>, vector<1x128xf32>
    %20 = vector.broadcast %19 : vector<1x128xf32> to vector<8x128xf32>
    %21 = arith.addf %18, %20 : vector<8x128xf32>
    %c0_17 = arith.constant 0 : index
    %c0_18 = arith.constant 0 : index
    %22 = vector.load %arg8[%c0_17, %c0_18] : memref<8x128xf32, #tpu.memory_space<vmem>>, vector<8x128xf32>
    tpu.vector_store %arg8[%c0_17, %c0_18], %21 {strides = array<i32>} : memref<8x128xf32, #tpu.memory_space<vmem>>, vector<8x128xf32>,
    return
  }
  func.func @transform_0(%arg0: i32) -> (i32, i32) {
    %c0_i32 = arith.constant 0 : i32
    %c0_i32_0 = arith.constant 0 : i32
    return %arg0, %c0_i32 : i32, i32
  }
  func.func @transform_1(%arg0: i32) -> (i32, i32) {
    %c0_i32 = arith.constant 0 : i32
    %c0_i32_0 = arith.constant 0 : i32
    %c0_i32_1 = arith.constant 0 : i32
    return %c0_i32, %c0_i32_0 : i32, i32
  }
  func.func @transform_2(%arg0: i32) -> (i32, i32) {
    %c0_i32 = arith.constant 0 : i32
    %c0_i32_0 = arith.constant 0 : i32
    %c0_i32_1 = arith.constant 0 : i32
    return %c0_i32, %c0_i32_0 : i32, i32
  }
  func.func @transform_3(%arg0: i32) -> (i32, i32) {
    %c0_i32 = arith.constant 0 : i32
    %c0_i32_0 = arith.constant 0 : i32
    %c0_i32_1 = arith.constant 0 : i32
    return %c0_i32, %c0_i32_0 : i32, i32
  }
  func.func @transform_4(%arg0: i32) -> (i32, i32) {
    %c0_i32 = arith.constant 0 : i32
    %c0_i32_0 = arith.constant 0 : i32
    %c0_i32_1 = arith.constant 0 : i32
    return %c0_i32, %c0_i32_0 : i32, i32
  }
  func.func @transform_5(%arg0: i32) -> (i32, i32) {
    %c0_i32 = arith.constant 0 : i32
    %c0_i32_0 = arith.constant 0 : i32
    %c0_i32_1 = arith.constant 0 : i32
    return %c0_i32, %c0_i32_0 : i32, i32
  }
  func.func @transform_6(%arg0: i32) -> (i32, i32) {
    %c0_i32 = arith.constant 0 : i32
    %c0_i32_0 = arith.constant 0 : i32
    %c0_i32_1 = arith.constant 0 : i32
    return %c0_i32, %c0_i32_0 : i32, i32
  }
  func.func @transform_7(%arg0: i32) -> (i32, i32) {
    %c0_i32 = arith.constant 0 : i32
    %c0_i32_0 = arith.constant 0 : i32
    return %arg0, %c0_i32 : i32, i32
  }
}

</mosaic_0001>

<llo_original>
// kernel: tpu_custom_call.1
$region0: #{tpu_custom_call.1}
  #allocation0 [shape = 'u32[]', space=smem, size = 0x4, offset = 0x4, fixed_abs, tag = 'smem constant byte address 0x4 - core index']
  #allocation1 [shape = 'u32[72,128]{1,0:T(1,128)}', space=vmem, size = 0x9000, scoped, tag = 'internal scratch']
  %s0 = inlined_call_operand.hbm [shape: bf16[8,11], index: 0, kind: input, shape index: {}]
  %s1 = inlined_call_operand.hbm [shape: bf16[11,256], index: 1, kind: input, shape index: {}]
  %s2 = inlined_call_operand.hbm [shape: f32[1,256], index: 2, kind: input, shape index: {}]
  %s3 = inlined_call_operand.hbm [shape: bf16[256,128], index: 3, kind: input, shape index: {}]
  %s4 = inlined_call_operand.vmem [shape: f32[1,128], index: 4, kind: input, shape index: {}]
  %s5 = inlined_call_operand.hbm [shape: bf16[128,128], index: 5, kind: input, shape index: {}]
  %s6 = inlined_call_operand.vmem [shape: f32[1,128], index: 6, kind: input, shape index: {}]
  %s7 = inlined_call_operand.hbm [shape: f32[8,128], index: 7, kind: output, shape index: {}]
  %s8 = sld [smem:[#allocation0]]
  $region58: #{tpu_custom_call.1} parent=0
    _
  %s10 = ssub.s32 1, %s8
  %s11 = scalar_select 0, %s10, %s8
  $region1: #{tpu_custom_call.1} parent=0
    #allocation2 [shape = 'u8[2048]{0}', space=vmem, size = 0x800, scoped, tag = 'input window, operand 0, single buffered']
    #allocation3 [shape = 's32[1]{0}', space=sflag, size = 0x4, scoped, tag = 'scoped memory for tpu_custom_call.1']
    #allocation4 [shape = 's32[1]{0}', space=sflag, size = 0x4, scoped, tag = 'scoped memory for tpu_custom_call.1']
    #allocation5 [shape = 'u8[8192]{0}', space=vmem, size = 0x2000, scoped, tag = 'input window, operand 1, single buffered']
    #allocation6 [shape = 's32[1]{0}', space=sflag, size = 0x4, scoped, tag = 'scoped memory for tpu_custom_call.1']
    #allocation7 [shape = 'u8[1024]{0}', space=vmem, size = 0x400, scoped, tag = 'input window, operand 2, single buffered']
    #allocation8 [shape = 'u8[65536]{0}', space=vmem, size = 0x10000, scoped, tag = 'input window, operand 3, single buffered']
    #allocation9 [shape = 's32[1]{0}', space=sflag, size = 0x4, scoped, tag = 'scoped memory for tpu_custom_call.1']
    #allocation10 [shape = 'u8[32768]{0}', space=vmem, size = 0x8000, scoped, tag = 'input window, operand 5, single buffered']
    #allocation11 [shape = 'u8[4096]{0}', space=vmem, size = 0x1000, scoped, tag = 'output window, operand 0, single buffered']
    %12 = vsyncpa [#allocation3], 0
    %13 = vsyncpa [#allocation6], 0
    %14 = vsyncpa [#allocation9], 0
    %15 = vsyncpa [#allocation4], 0
    // Predicated region
    $region2: #{tpu_custom_call.1} parent=1 // pred_check
      _
    $region3: #{tpu_custom_call.1} parent=1 // pred_check_branch
      %17 = sbr.rel (0) target = $region5
    $region4: #{tpu_custom_call.1} parent=1 // pred_region
      %19 = vsyncadd [#allocation3], 0
      %s21 = sshll.u32 %s0, 4
      %s22 = int_to_ptr.hbm [resolvable:$true] %s21
      %s23 = sshll.u32 [#allocation2], 4
      %s24 = int_to_ptr.vmem [resolvable:$true] %s23
      %26 = dma.hbm_to_vmem [thread:$0]  %s22, 64, %s24, [#allocation3]
    $region5: #{tpu_custom_call.1} parent=1 // pred_fallthru
      _
    // Predicated region
    $region6: #{tpu_custom_call.1} parent=1 // pred_check
      _
    $region7: #{tpu_custom_call.1} parent=1 // pred_check_branch
      %28 = sbr.rel (0) target = $region9
    $region8: #{tpu_custom_call.1} parent=1 // pred_region
      %30 = vsyncadd [#allocation6], 0
      %s31 = sshll.u32 %s1, 4
      %s32 = int_to_ptr.hbm [resolvable:$true] %s31
      %s33 = sshll.u32 [#allocation5], 4
      %s34 = int_to_ptr.vmem [resolvable:$true] %s33
      %39 = dma.hbm_to_vmem [thread:$0]  %s32, 256, %s34, [#allocation6], 128, 128, 8
    $region9: #{tpu_custom_call.1} parent=1 // pred_fallthru
      _
    // Predicated region
    $region10: #{tpu_custom_call.1} parent=1 // pred_check
      _
    $region11: #{tpu_custom_call.1} parent=1 // pred_check_branch
      %41 = sbr.rel (0) target = $region13
    $region12: #{tpu_custom_call.1} parent=1 // pred_region
      %43 = vsyncadd [#allocation6], 0
      %s45 = sshll.u32 %s2, 4
      %s46 = int_to_ptr.hbm [resolvable:$true] %s45
      %s47 = sshll.u32 [#allocation7], 4
      %s48 = int_to_ptr.vmem [resolvable:$true] %s47
      %50 = dma.hbm_to_vmem [thread:$0]  %s46, 32, %s48, [#allocation6]
    $region13: #{tpu_custom_call.1} parent=1 // pred_fallthru
      _
    // Predicated region
    $region14: #{tpu_custom_call.1} parent=1 // pred_check
      _
    $region15: #{tpu_custom_call.1} parent=1 // pred_check_branch
      %52 = sbr.rel (0) target = $region17
    $region16: #{tpu_custom_call.1} parent=1 // pred_region
      %54 = vsyncadd [#allocation9], 0
      %s55 = sshll.u32 %s3, 4
      %s56 = int_to_ptr.hbm [resolvable:$true] %s55
      %s57 = sshll.u32 [#allocation8], 4
      %s58 = int_to_ptr.vmem [resolvable:$true] %s57
      %63 = dma.hbm_to_vmem [thread:$0]  %s56, 2048, %s58, [#allocation9], 64, 64, 4
    $region17: #{tpu_custom_call.1} parent=1 // pred_fallthru
      _
    // Predicated region
    $region18: #{tpu_custom_call.1} parent=1 // pred_check
      _
    $region19: #{tpu_custom_call.1} parent=1 // pred_check_branch
      %65 = sbr.rel (0) target = $region21
    $region20: #{tpu_custom_call.1} parent=1 // pred_region
      _
    $region21: #{tpu_custom_call.1} parent=1 // pred_fallthru
      _
    // Predicated region
    $region22: #{tpu_custom_call.1} parent=1 // pred_check
      _
    $region23: #{tpu_custom_call.1} parent=1 // pred_check_branch
      %67 = sbr.rel (0) target = $region25
    $region24: #{tpu_custom_call.1} parent=1 // pred_region
      %69 = vsyncadd [#allocation9], 0
      %s70 = sshll.u32 %s5, 4
      %s71 = int_to_ptr.hbm [resolvable:$true] %s70
      %s72 = sshll.u32 [#allocation10], 4
      %s73 = int_to_ptr.vmem [resolvable:$true] %s72
      %78 = dma.hbm_to_vmem [thread:$0]  %s71, 1024, %s73, [#allocation9], 64, 64, 4
    $region25: #{tpu_custom_call.1} parent=1 // pred_fallthru
      _
    // Predicated region
    $region26: #{tpu_custom_call.1} parent=1 // pred_check
      _
    $region27: #{tpu_custom_call.1} parent=1 // pred_check_branch
      %80 = sbr.rel (0) target = $region29
    $region28: #{tpu_custom_call.1} parent=1 // pred_region
      _
    $region29: #{tpu_custom_call.1} parent=1 // pred_fallthru
      _
    // Predicated region
    $region30: #{tpu_custom_call.1} parent=1 // pred_check
      _
    $region31: #{tpu_custom_call.1} parent=1 // pred_check_branch
      %82 = sbr.rel (0) target = $region33
    $region32: #{tpu_custom_call.1} parent=1 // pred_region
      %84 = dma.done [#allocation3], 64
    $region33: #{tpu_custom_call.1} parent=1 // pred_fallthru
      _
    // Predicated region
    $region34: #{tpu_custom_call.1} parent=1 // pred_check
      _
    $region35: #{tpu_custom_call.1} parent=1 // pred_check_branch
      %86 = sbr.rel (0) target = $region37
    $region36: #{tpu_custom_call.1} parent=1 // pred_region
      %88 = dma.done [#allocation6], 256
    $region37: #{tpu_custom_call.1} parent=1 // pred_fallthru
      _
    // Predicated region
    $region38: #{tpu_custom_call.1} parent=1 // pred_check
      _
    $region39: #{tpu_custom_call.1} parent=1 // pred_check_branch
      %90 = sbr.rel (0) target = $region41
    $region40: #{tpu_custom_call.1} parent=1 // pred_region
      %92 = dma.done [#allocation6], 32
    $region41: #{tpu_custom_call.1} parent=1 // pred_fallthru
      _
    // Predicated region
    $region42: #{tpu_custom_call.1} parent=1 // pred_check
      _
    $region43: #{tpu_custom_call.1} parent=1 // pred_check_branch
      %94 = sbr.rel (0) target = $region45
    $region44: #{tpu_custom_call.1} parent=1 // pred_region
      %96 = dma.done [#allocation9], 2048
    $region45: #{tpu_custom_call.1} parent=1 // pred_fallthru
      _
    // Predicated region
    $region46: #{tpu_custom_call.1} parent=1 // pred_check
      _
    $region47: #{tpu_custom_call.1} parent=1 // pred_check_branch
      %98 = sbr.rel (0) target = $region49
    $region48: #{tpu_custom_call.1} parent=1 // pred_region
      %100 = dma.done [#allocation9], 1024
    $region49: #{tpu_custom_call.1} parent=1 // pred_fallthru
      _
    %v102 = vld [vmem:[#allocation2] sm:$0xf]
    %v103 = vld [vmem:[#allocation5] sm:$0xff]
    %v104 = vld [vmem:[#allocation5 + $0x8] sm:$0x33]
    %v105 = vld [vmem:[#allocation7] sm:$0x3]
    %v107 = vperm.slane %v105, 0
    %v108 = vperm.slane %v105, 1
    %v113 = vunpack.c.l.b16 %v103
    %v114 = vunpack.c.h.b16 %v103
    %v115 = vunpack.c.l.b16 %v104
    %v116 = vunpack.c.h.b16 %v104
    %v117 = vpack.c.b16 %v115, %v113
    %v118 = vpack.c.b16 %v116, %v114
    %vm119 = vcmask 89088
    %v121 = vsel %vm119, %v102, 0
    %vm123 = vcmask 1044480
    %vm124 = vcmask 1045504
    %v125 = vsel %vm123, 4294967295, 65535
    %v126 = vsel %vm124, %v125, 0
    %v128 = vand.u32 %v117, %v126
    %v131 = vand.u32 %v118, %v126
    %133 = vmatpush.bf16.msra.mxu0 0
    %134 = vmatpush.bf16.msra.mxu0 0
    %135 = vmatpush.bf16.msra.mxu0 0
    %136 = vmatpush.bf16.msra.mxu0 0
    %137 = vmatpush.bf16.msra.mxu0 0
    %138 = vmatpush.bf16.msra.mxu0 0
    %139 = vmatpush.bf16.msra.mxu0 0
    %140 = vmatpush.bf16.msra.mxu0 %v128
    %141 = vmatmul.bf16.gmra.mxu0 %v121
    %v142 = vpop.f32.mrf.mxu0
    %v143 = vadd.f32 %v107, %v142
    %v144 = vpop.f32.mrf.mxu0
    %145 = vdwg.mxu0
    %146 = vmatpush.bf16.msra.mxu0 0
    %147 = vmatpush.bf16.msra.mxu0 0
    %148 = vmatpush.bf16.msra.mxu0 0
    %149 = vmatpush.bf16.msra.mxu0 0
    %150 = vmatpush.bf16.msra.mxu0 0
    %151 = vmatpush.bf16.msra.mxu0 0
    %152 = vmatpush.bf16.msra.mxu0 0
    %153 = vmatpush.bf16.msra.mxu0 %v131
    %154 = vmatmul.bf16.gmra.mxu0 %v121
    %v155 = vpop.f32.mrf.mxu0
    %v156 = vadd.f32 %v108, %v155
    %v157 = vpop.f32.mrf.mxu0
    %158 = vdwg.mxu0
    %v159 = vmax.f32 %v143, 0.0
    %v160 = vmax.f32 %v156, 0.0
    %v161 = vpack.c.bf16 %v159, %v159
    %v162 = vpack.c.bf16 %v160, %v160
    %v163 = vld [vmem:[#allocation8] sm:$0xf]
    %v164 = vld [vmem:[#allocation8 + $0x4] sm:$0xf]
    %v165 = vld [vmem:[#allocation8 + $0x8] sm:$0xf]
    %v166 = vld [vmem:[#allocation8 + $0xc] sm:$0xf]
    %v167 = vld [vmem:[#allocation8 + $0x10] sm:$0xf]
    %v168 = vld [vmem:[#allocation8 + $0x14] sm:$0xf]
    %v169 = vld [vmem:[#allocation8 + $0x18] sm:$0xf]
    %v170 = vld [vmem:[#allocation8 + $0x1c] sm:$0xf]
    %v171 = vld [vmem:[#allocation8 + $0x20] sm:$0xf]
    %v172 = vld [vmem:[#allocation8 + $0x24] sm:$0xf]
    %v173 = vld [vmem:[#allocation8 + $0x28] sm:$0xf]
    %v174 = vld [vmem:[#allocation8 + $0x2c] sm:$0xf]
    %v175 = vld [vmem:[#allocation8 + $0x30] sm:$0xf]
    %v176 = vld [vmem:[#allocation8 + $0x34] sm:$0xf]
    %v177 = vld [vmem:[#allocation8 + $0x38] sm:$0xf]
    %v178 = vld [vmem:[#allocation8 + $0x3c] sm:$0xf]
    %v179 = vld [vmem:[#allocation8 + $0x40] sm:$0xf]
    %v180 = vld [vmem:[#allocation8 + $0x44] sm:$0xf]
    %v181 = vld [vmem:[#allocation8 + $0x48] sm:$0xf]
    %v182 = vld [vmem:[#allocation8 + $0x4c] sm:$0xf]
    %v183 = vld [vmem:[#allocation8 + $0x50] sm:$0xf]
    %v184 = vld [vmem:[#allocation8 + $0x54] sm:$0xf]
    %v185 = vld [vmem:[#allocation8 + $0x58] sm:$0xf]
    %v186 = vld [vmem:[#allocation8 + $0x5c] sm:$0xf]
    %v187 = vld [vmem:[#allocation8 + $0x60] sm:$0xf]
    %v188 = vld [vmem:[#allocation8 + $0x64] sm:$0xf]
    %v189 = vld [vmem:[#allocation8 + $0x68] sm:$0xf]
    %v190 = vld [vmem:[#allocation8 + $0x6c] sm:$0xf]
    %v191 = vld [vmem:[#allocation8 + $0x70] sm:$0xf]
    %v192 = vld [vmem:[#allocation8 + $0x74] sm:$0xf]
    %v193 = vld [vmem:[#allocation8 + $0x78] sm:$0xf]
    %v194 = vld [vmem:[#allocation8 + $0x7c] sm:$0xf]
    %v195 = vld [vmem:[%s4] sm:$0x1]
    %v197 = vperm.slane %v195, 0
    %v231 = vunpack.c.l.b16 %v163
    %v232 = vunpack.c.l.b16 %v164
    %v233 = vunpack.c.l.b16 %v165
    %v234 = vunpack.c.l.b16 %v166
    %v235 = vunpack.c.l.b16 %v167
    %v236 = vunpack.c.l.b16 %v168
    %v237 = vunpack.c.l.b16 %v169
    %v238 = vunpack.c.l.b16 %v170
    %v239 = vunpack.c.l.b16 %v171
    %v240 = vunpack.c.l.b16 %v172
    %v241 = vunpack.c.l.b16 %v173
    %v242 = vunpack.c.l.b16 %v174
    %v243 = vunpack.c.l.b16 %v175
    %v244 = vunpack.c.l.b16 %v176
    %v245 = vunpack.c.l.b16 %v177
    %v246 = vunpack.c.l.b16 %v178
    %v247 = vunpack.c.l.b16 %v179
    %v248 = vunpack.c.l.b16 %v180
    %v249 = vunpack.c.l.b16 %v181
    %v250 = vunpack.c.l.b16 %v182
    %v251 = vunpack.c.l.b16 %v183
    %v252 = vunpack.c.l.b16 %v184
    %v253 = vunpack.c.l.b16 %v185
    %v254 = vunpack.c.l.b16 %v186
    %v255 = vunpack.c.l.b16 %v187
    %v256 = vunpack.c.l.b16 %v188
    %v257 = vunpack.c.l.b16 %v189
    %v258 = vunpack.c.l.b16 %v190
    %v259 = vunpack.c.l.b16 %v191
    %v260 = vunpack.c.l.b16 %v192
    %v261 = vunpack.c.l.b16 %v193
    %v262 = vunpack.c.l.b16 %v194
    %v263 = vpack.c.b16 %v232, %v231
    %v264 = vpack.c.b16 %v234, %v233
    %v265 = vpack.c.b16 %v236, %v235
    %v266 = vpack.c.b16 %v238, %v237
    %v267 = vpack.c.b16 %v240, %v239
    %v268 = vpack.c.b16 %v242, %v241
    %v269 = vpack.c.b16 %v244, %v243
    %v270 = vpack.c.b16 %v246, %v245
    %v271 = vpack.c.b16 %v248, %v247
    %v272 = vpack.c.b16 %v250, %v249
    %v273 = vpack.c.b16 %v252, %v251
    %v274 = vpack.c.b16 %v254, %v253
    %v275 = vpack.c.b16 %v256, %v255
    %v276 = vpack.c.b16 %v258, %v257
    %v277 = vpack.c.b16 %v260, %v259
    %v278 = vpack.c.b16 %v262, %v261
    %295 = vmatpush.bf16.msra.mxu0 %v270
    %296 = vmatpush.bf16.msra.mxu0 %v269
    %297 = vmatpush.bf16.msra.mxu0 %v268
    %298 = vmatpush.bf16.msra.mxu0 %v267
    %299 = vmatpush.bf16.msra.mxu0 %v266
    %300 = vmatpush.bf16.msra.mxu0 %v265
    %301 = vmatpush.bf16.msra.mxu0 %v264
    %302 = vmatpush.bf16.msra.mxu0 %v263
    %303 = vmatmul.bf16.gmra.mxu0 %v161
    %v304 = vpop.f32.mrf.mxu0
    %v305 = vadd.f32 %v197, %v304
    %v306 = vpop.f32.mrf.mxu0
    %307 = vdwg.mxu0
    %308 = vmatpush.bf16.msra.mxu0 %v278
    %309 = vmatpush.bf16.msra.mxu0 %v277
    %310 = vmatpush.bf16.msra.mxu0 %v276
    %311 = vmatpush.bf16.msra.mxu0 %v275
    %312 = vmatpush.bf16.msra.mxu0 %v274
    %313 = vmatpush.bf16.msra.mxu0 %v273
    %314 = vmatpush.bf16.msra.mxu0 %v272
    %315 = vmatpush.bf16.msra.mxu0 %v271
    %316 = vmatmul.bf16.gmra.mxu0 %v162
    %v317 = vpop.f32.mrf.mxu0
    %v318 = vadd.f32 %v305, %v317
    %v319 = vpop.f32.mrf.mxu0
    %320 = vdwg.mxu0
    %v321 = vmax.f32 %v318, 0.0
    %v322 = vpack.c.bf16 %v321, %v321
    %v323 = vld [vmem:[#allocation10] sm:$0xf]
    %v324 = vld [vmem:[#allocation10 + $0x4] sm:$0xf]
    %v325 = vld [vmem:[#allocation10 + $0x8] sm:$0xf]
    %v326 = vld [vmem:[#allocation10 + $0xc] sm:$0xf]
    %v327 = vld [vmem:[#allocation10 + $0x10] sm:$0xf]
    %v328 = vld [vmem:[#allocation10 + $0x14] sm:$0xf]
    %v329 = vld [vmem:[#allocation10 + $0x18] sm:$0xf]
    %v330 = vld [vmem:[#allocation10 + $0x1c] sm:$0xf]
    %v331 = vld [vmem:[#allocation10 + $0x20] sm:$0xf]
    %v332 = vld [vmem:[#allocation10 + $0x24] sm:$0xf]
    %v333 = vld [vmem:[#allocation10 + $0x28] sm:$0xf]
    %v334 = vld [vmem:[#allocation10 + $0x2c] sm:$0xf]
    %v335 = vld [vmem:[#allocation10 + $0x30] sm:$0xf]
    %v336 = vld [vmem:[#allocation10 + $0x34] sm:$0xf]
    %v337 = vld [vmem:[#allocation10 + $0x38] sm:$0xf]
    %v338 = vld [vmem:[#allocation10 + $0x3c] sm:$0xf]
    %v339 = vld [vmem:[%s6] sm:$0x1]
    %v341 = vperm.slane %v339, 0
    %v359 = vunpack.c.l.b16 %v323
    %v360 = vunpack.c.l.b16 %v324
    %v361 = vunpack.c.l.b16 %v325
    %v362 = vunpack.c.l.b16 %v326
    %v363 = vunpack.c.l.b16 %v327
    %v364 = vunpack.c.l.b16 %v328
    %v365 = vunpack.c.l.b16 %v329
    %v366 = vunpack.c.l.b16 %v330
    %v367 = vunpack.c.l.b16 %v331
    %v368 = vunpack.c.l.b16 %v332
    %v369 = vunpack.c.l.b16 %v333
    %v370 = vunpack.c.l.b16 %v334
    %v371 = vunpack.c.l.b16 %v335
    %v372 = vunpack.c.l.b16 %v336
    %v373 = vunpack.c.l.b16 %v337
    %v374 = vunpack.c.l.b16 %v338
    %v375 = vpack.c.b16 %v360, %v359
    %v376 = vpack.c.b16 %v362, %v361
    %v377 = vpack.c.b16 %v364, %v363
    %v378 = vpack.c.b16 %v366, %v365
    %v379 = vpack.c.b16 %v368, %v367
    %v380 = vpack.c.b16 %v370, %v369
    %v381 = vpack.c.b16 %v372, %v371
    %v382 = vpack.c.b16 %v374, %v373
    %391 = vmatpush.bf16.msra.mxu0 %v382
    %392 = vmatpush.bf16.msra.mxu0 %v381
    %393 = vmatpush.bf16.msra.mxu0 %v380
    %394 = vmatpush.bf16.msra.mxu0 %v379
    %395 = vmatpush.bf16.msra.mxu0 %v378
    %396 = vmatpush.bf16.msra.mxu0 %v377
    %397 = vmatpush.bf16.msra.mxu0 %v376
    %398 = vmatpush.bf16.msra.mxu0 %v375
    %399 = vmatmul.bf16.gmra.mxu0 %v322
    %v400 = vpop.f32.mrf.mxu0
    %v401 = vadd.f32 %v341, %v400
    %v402 = vpop.f32.mrf.mxu0
    %403 = vdwg.mxu0
    %404 = vst [vmem:[#allocation11] sm:$0xff] %v401
    // Predicated region
    $region50: #{tpu_custom_call.1} parent=1 // pred_check
      _
    $region51: #{tpu_custom_call.1} parent=1 // pred_check_branch
      %406 = sbr.rel (0) target = $region53
    $region52: #{tpu_custom_call.1} parent=1 // pred_region
      %408 = vsyncadd [#allocation4], 0
      %s410 = sshll.u32 [#allocation11], 4
      %s411 = int_to_ptr.vmem [resolvable:$true] %s410
      %s412 = sshll.u32 %s7, 4
      %s413 = int_to_ptr.hbm [resolvable:$true] %s412
      %415 = dma.vmem_to_hbm [thread:$0]  %s411, 128, %s413, [#allocation4]
    $region53: #{tpu_custom_call.1} parent=1 // pred_fallthru
      _
    // Predicated region
    $region54: #{tpu_custom_call.1} parent=1 // pred_check
      _
    $region55: #{tpu_custom_call.1} parent=1 // pred_check_branch
      %417 = sbr.rel (0) target = $region57
    $region56: #{tpu_custom_call.1} parent=1 // pred_region
      %419 = dma.done [#allocation4], 128
    $region57: #{tpu_custom_call.1} parent=1 // pred_fallthru
      _
    %420 = vsyncpa [#allocation3], 1
    %421 = vsyncpa [#allocation6], 1
    %422 = vsyncpa [#allocation9], 1
    %423 = vsyncpa [#allocation4], 1

</llo_original>
